<compile_context>
chip_gen: v7x
topology: tpu7x:2x2x1
jax: 0.10.0
libtpu: 0.0.40
codegen_flags: <defaults>
</compile_context>

<pallas_src>
import functools
import math

import jax
import jax.numpy as jnp
from jax.experimental import pallas as pl
from jax.experimental.pallas import tpu as pltpu

NEG_SLOPE = 0.1            # nn.LeakyReLU(negative_slope=0.1)
LANE_DENSE_MIN_ROWS = 128  # switch to the (C, M) lane-dense layout at this M


def _round_up(x, m):
    return (x + m - 1) // m * m


def _pick_tile(M, *, unit, max_tile):
    """Even work split; >= 2 grid blocks when possible (v7x dual-TC);
    tile is a multiple of `unit` (8 sublanes / 128 lanes)."""
    if M <= unit:
        return M                                   # single full-extent block
    n_blocks = max(2, pl.cdiv(M, max_tile))
    return min(max_tile, _round_up(pl.cdiv(M, n_blocks), unit))


# ----------------------------------------------------------------------------
# Kernel A: row layout.  One row per (n, d); channels on the lane axis.
#   p:(tm, C)  w1:(C, Cr)  b1:(1, Cr)  w2:(Cr, C)  b2:(1, C)  ->  o:(tm, C)
# ----------------------------------------------------------------------------
def _cab3d_rows_kernel(p_ref, w1_ref, b1_ref, w2_ref, b2_ref, o_ref, *,
                       neg_slope):
    h = jnp.dot(p_ref[...], w1_ref[...],
                preferred_element_type=jnp.float32,
                precision=jax.lax.Precision.HIGHEST) + b1_ref[...]
    h = jnp.where(h >= 0, h, neg_slope * h)                      # LeakyReLU
    y = jnp.dot(h, w2_ref[...],
                preferred_element_type=jnp.float32,
                precision=jax.lax.Precision.HIGHEST) + b2_ref[...]
    m = jnp.max(y, axis=-1, keepdims=True)                       # per row
    e = jnp.exp(y - m)
    s = jnp.sum(e, axis=-1, keepdims=True)
    o_ref[...] = (e * pl.reciprocal(s, approx=False)).astype(o_ref.dtype)


# ----------------------------------------------------------------------------
# Kernel B: lane-dense layout.  Channels on sublanes, (n, d) rows on lanes.
#   p:(C, tn)  w1t:(Cr, C)  b1:(Cr, 1)  w2t:(C, Cr)  b2:(C, 1)  ->  o:(C, tn)
# ----------------------------------------------------------------------------
def _cab3d_cols_kernel(p_ref, w1t_ref, b1_ref, w2t_ref, b2_ref, o_ref, *,
                       neg_slope):
    h = jnp.dot(w1t_ref[...], p_ref[...],
                preferred_element_type=jnp.float32,
                precision=jax.lax.Precision.HIGHEST) + b1_ref[...]
    h = jnp.where(h >= 0, h, neg_slope * h)                      # LeakyReLU
    y = jnp.dot(w2t_ref[...], h,
                preferred_element_type=jnp.float32,
                precision=jax.lax.Precision.HIGHEST) + b2_ref[...]
    m = jnp.max(y, axis=0, keepdims=True)                        # per column
    e = jnp.exp(y - m)
    s = jnp.sum(e, axis=0, keepdims=True)
    o_ref[...] = (e * pl.reciprocal(s, approx=False)).astype(o_ref.dtype)


# ----------------------------------------------------------------------------
# pallas_call wrappers
# ----------------------------------------------------------------------------
def _ca_block_rows(rows, w1, b1, w2, b2, *, neg_slope=NEG_SLOPE, max_tm=4096):
    """(M, C) pooled rows -> (M, C) channel-softmax weights."""
    M, C = rows.shape
    Cr = w1.shape[1]
    tm = _pick_tile(M, unit=8, max_tile=max_tm)
    return pl.pallas_call(
        functools.partial(_cab3d_rows_kernel, neg_slope=neg_slope),
        out_shape=jax.ShapeDtypeStruct((M, C), jnp.float32),
        grid_spec=pltpu.PrefetchScalarGridSpec(
            num_scalar_prefetch=0,
            grid=(pl.cdiv(M, tm),),
            in_specs=[
                pl.BlockSpec((tm, C), lambda i: (i, 0)),
                pl.BlockSpec((C, Cr), lambda i: (0, 0)),
                pl.BlockSpec((1, Cr), lambda i: (0, 0)),
                pl.BlockSpec((Cr, C), lambda i: (0, 0)),
                pl.BlockSpec((1, C), lambda i: (0, 0)),
            ],
            out_specs=pl.BlockSpec((tm, C), lambda i: (i, 0)),
        ),
        compiler_params=pltpu.CompilerParams(
            dimension_semantics=("parallel",)),
    )(rows, w1, b1, w2, b2)


def _ca_block_cols(cols, w1t, b1, w2t, b2, *, neg_slope=NEG_SLOPE, max_tn=2048):
    """(C, M) pooled columns -> (C, M) channel-softmax weights (lane-dense)."""
    C, M = cols.shape
    Cr = w1t.shape[0]
    tn = _pick_tile(M, unit=128, max_tile=max_tn)
    return pl.pallas_call(
        functools.partial(_cab3d_cols_kernel, neg_slope=neg_slope),
        out_shape=jax.ShapeDtypeStruct((C, M), jnp.float32),
        grid_spec=pltpu.PrefetchScalarGridSpec(
            num_scalar_prefetch=0,
            grid=(pl.cdiv(M, tn),),
            in_specs=[
                pl.BlockSpec((C, tn), lambda i: (0, i)),
                pl.BlockSpec((Cr, C), lambda i: (0, 0)),
                pl.BlockSpec((Cr, 1), lambda i: (0, 0)),
                pl.BlockSpec((C, Cr), lambda i: (0, 0)),
                pl.BlockSpec((C, 1), lambda i: (0, 0)),
            ],
            out_specs=pl.BlockSpec((C, tn), lambda i: (0, i)),
        ),
        compiler_params=pltpu.CompilerParams(
            dimension_semantics=("parallel",)),
    )(cols, w1t, b1, w2t, b2)


# ----------------------------------------------------------------------------
# Parameters & module forward
# ----------------------------------------------------------------------------
def convert_conv_params(w1_conv, b1, w2_conv, b2):
    """PyTorch Conv3d 1x1x1 weights -> both kernel layouts, f32, done ONCE.

    w1_conv: (Cr, C, 1, 1, 1), b1: (Cr,)
    w2_conv: (C, Cr, 1, 1, 1), b2: (C,)
    """
    cr, c = w1_conv.shape[:2]
    w1t = jnp.asarray(w1_conv, jnp.float32).reshape(cr, c)        # (Cr, C)
    w2t = jnp.asarray(w2_conv, jnp.float32).reshape(c, cr)        # (C, Cr)
    b1 = jnp.asarray(b1, jnp.float32)
    b2 = jnp.asarray(b2, jnp.float32)
    return {
        # (M, C) row layout
        "w1_rows": w1t.T, "b1_rows": b1.reshape(1, cr),
        "w2_rows": w2t.T, "b2_rows": b2.reshape(1, c),
        # (C, M) lane-dense layout
        "w1_cols": w1t, "b1_cols": b1.reshape(cr, 1),
        "w2_cols": w2t, "b2_cols": b2.reshape(c, 1),
    }


@jax.jit
def cab3d_forward(x, params):
    """CAB3d.forward.  x: (N, C, D, H, W) -> softmax weights (N, C, D, 1, 1)."""
    N, C, D, H, W = x.shape
    # AdaptiveAvgPool3d((None, 1, 1)) == mean over H, W.  Kept in XLA: a single
    # bandwidth-optimal read of x emitting a tiny (N, C, D) tensor; upcast
    # first so bf16 inputs don't lose precision accumulating over H*W.
    pooled = jnp.mean(x.astype(jnp.float32), axis=(3, 4))          # (N, C, D)
    M = N * D
    if M >= LANE_DENSE_MIN_ROWS:
        cols = pooled.transpose(1, 0, 2).reshape(C, M)             # (C, N*D)
        w = _ca_block_cols(cols, params["w1_cols"], params["b1_cols"],
                           params["w2_cols"], params["b2_cols"])
        w = w.reshape(C, N, D).transpose(1, 0, 2)                  # (N, C, D)
    else:
        rows = pooled.transpose(0, 2, 1).reshape(M, C)             # (N*D, C)
        w = _ca_block_rows(rows, params["w1_rows"], params["b1_rows"],
                           params["w2_rows"], params["b2_rows"])
        w = w.reshape(N, D, C).transpose(0, 2, 1)                  # (N, C, D)
    return w[:, :, :, None, None]


# ----------------------------------------------------------------------------
# Pure-JAX reference + self-test
# ----------------------------------------------------------------------------
def _reference(x, params):
    N, C, D, H, W = x.shape
    pooled = jnp.mean(x.astype(jnp.float32), axis=(3, 4))
    p = pooled.transpose(0, 2, 1).reshape(N * D, C)
    h = jnp.dot(p, params["w1_rows"],
                precision=jax.lax.Precision.HIGHEST) + params["b1_rows"]
    h = jnp.where(h >= 0, h, NEG_SLOPE * h)
    y = jnp.dot(h, params["w2_rows"],
                precision=jax.lax.Precision.HIGHEST) + params["b2_rows"]
    w = jax.nn.softmax(y, axis=-1)
    return w.reshape(N, D, C).transpose(0, 2, 1)[:, :, :, None, None]


def _make_params(key, C, reduction):
    Cr = C // reduction
    k1, k2, k3, k4 = jax.random.split(key, 4)
    w1_conv = jax.random.normal(k1, (Cr, C, 1, 1, 1), jnp.float32) / math.sqrt(C)
    b1 = jax.random.normal(k2, (Cr,), jnp.float32) * 0.05
    w2_conv = jax.random.normal(k3, (C, Cr, 1, 1, 1), jnp.float32) / math.sqrt(Cr)
    b2 = jax.random.normal(k4, (C,), jnp.float32) * 0.05
    return convert_conv_params(w1_conv, b1, w2_conv, b2)


if __name__ == "__main__":
    key = jax.random.PRNGKey(0)

    # Case 1: small N*D -> (M, C) row-layout kernel (ragged last row block).
    # Case 2: N*D >= 128 -> (C, M) lane-dense kernel (ragged last lane block,
    #         2 grid blocks -> both v7x TensorCores get work).
    cases = [
        dict(N=2, C=16, D=5, H=8, W=8, reduction=2),    # M = 10
        dict(N=2, C=48, D=80, H=4, W=4, reduction=2),   # M = 160
    ]
    for idx, cfg in enumerate(cases):
        kx, kp, key = jax.random.split(key, 3)
        N, C, D, H, W = cfg["N"], cfg["C"], cfg["D"], cfg["H"], cfg["W"]
        x = jax.random.normal(kx, (N, C, D, H, W), jnp.float32)
        params = _make_params(kp, C, cfg["reduction"])

        out = jax.block_until_ready(cab3d_forward(x, params))
        assert out.shape == (N, C, D, 1, 1), (idx, out.shape)
        assert bool(jnp.all(jnp.isfinite(out))), idx

        ref = _reference(x, params)
        assert bool(jnp.allclose(out, ref, atol=1e-3, rtol=1e-3)), (
            f"case {idx}: max abs err {float(jnp.max(jnp.abs(out - ref)))}")
        # Softmax over the channel dim must sum to 1.
        assert bool(jnp.allclose(jnp.sum(out, axis=1), 1.0, atol=1e-4)), idx

    print("KERNEL_OK")
</pallas_src>

<mosaic_0001>
module attributes {stable_mosaic.version = 11 : i64} {
  func.func @_cab3d_rows_kernel(%arg0: i32, %arg1: memref<8x16xf32, #tpu.memory_space<vmem>>, %arg2: memref<16x8xf32, #tpu.memory_space<vmem>>, %arg3: memref<1x8xf32, #tpu.memory_space<vmem>>, %arg4: memref<8x16xf32, #tpu.memory_space<vmem>>, %arg5: memref<1x16xf32, #tpu.memory_space<vmem>>, %arg6: memref<8x16xf32, #tpu.memory_space<vmem>>) attributes {dimension_semantics = [#tpu.dimension_semantics<parallel>], iteration_bounds = array<i64: 2>, scalar_prefetch = 0 : i64, scratch_operands = 0 : i64, tpu.core_type = #tpu.core_type<tc>, window_params = [{transform_indices = @transform_0, window_bounds = array<i64: 8, 16>}, {pipeline_mode = #tpu.pipeline_mode<synchronous>, transform_indices = @transform_1, window_bounds = array<i64: 16, 8>}, {pipeline_mode = #tpu.pipeline_mode<synchronous>, transform_indices = @transform_2, window_bounds = array<i64: 1, 8>}, {pipeline_mode = #tpu.pipeline_mode<synchronous>, transform_indices = @transform_3, window_bounds = array<i64: 8, 16>}, {pipeline_mode = #tpu.pipeline_mode<synchronous>, transform_indices = @transform_4, window_bounds = array<i64: 1, 16>}, {transform_indices = @transform_5, window_bounds = array<i64: 8, 16>}]} {
    %c0 = arith.constant 0 : index
    %c0_0 = arith.constant 0 : index
    %0 = vector.load %arg1[%c0, %c0_0] : memref<8x16xf32, #tpu.memory_space<vmem>>, vector<8x16xf32>
    %c0_1 = arith.constant 0 : index
    %c0_2 = arith.constant 0 : index
    %1 = vector.load %arg2[%c0_1, %c0_2] : memref<16x8xf32, #tpu.memory_space<vmem>>, vector<16x8xf32>
    %cst = arith.constant dense<0.000000e+00> : vector<8x8xf32>
    %2 = tpu.matmul %0, %1, %cst {dimension_numbers = #tpu.dot_dimension_numbers<[1], [0], [0], [1], [0, 0, 1, 1], [], []>, precision = #tpu.contract_precision<fp32>} : vector<8x16xf32>, vector<16x8xf32>, vector<8x8xf32> -> vector<8x8xf32>
    %c0_3 = arith.constant 0 : index
    %c0_4 = arith.constant 0 : index
    %3 = vector.load %arg3[%c0_3, %c0_4] : memref<1x8xf32, #tpu.memory_space<vmem>>, vector<1x8xf32>
    %4 = vector.broadcast %3 : vector<1x8xf32> to vector<8x8xf32>
    %5 = arith.addf %2, %4 : vector<8x8xf32>
    %cst_5 = arith.constant 0.000000e+00 : f32
    %6 = vector.broadcast %cst_5 : f32 to vector<8x8xf32>
    %7 = arith.cmpf oge, %5, %6 : vector<8x8xf32>
    %cst_6 = arith.constant 1.000000e-01 : f32
    %8 = vector.broadcast %cst_6 : f32 to vector<8x8xf32>
    %9 = arith.mulf %8, %5 : vector<8x8xf32>
    %10 = arith.select %7, %5, %9 : vector<8x8xi1>, vector<8x8xf32>
    %c0_7 = arith.constant 0 : index
    %c0_8 = arith.constant 0 : index
    %11 = vector.load %arg4[%c0_7, %c0_8] : memref<8x16xf32, #tpu.memory_space<vmem>>, vector<8x16xf32>
    %cst_9 = arith.constant dense<0.000000e+00> : vector<8x16xf32>
    %12 = tpu.matmul %10, %11, %cst_9 {dimension_numbers = #tpu.dot_dimension_numbers<[1], [0], [0], [1], [0, 0, 1, 1], [], []>, precision = #tpu.contract_precision<fp32>} : vector<8x8xf32>, vector<8x16xf32>, vector<8x16xf32> -> vector<8x16xf32>
    %c0_10 = arith.constant 0 : index
    %c0_11 = arith.constant 0 : index
    %13 = vector.load %arg5[%c0_10, %c0_11] : memref<1x16xf32, #tpu.memory_space<vmem>>, vector<1x16xf32>
    %14 = vector.broadcast %13 : vector<1x16xf32> to vector<8x16xf32>
    %15 = arith.addf %12, %14 : vector<8x16xf32>
    %cst_12 = arith.constant dense<0xFF800000> : vector<8xf32>
    %16 = vector.multi_reduction <maximumf>, %15, %cst_12 [1] : vector<8x16xf32> to vector<8xf32>
    %17 = vector.shape_cast %16 : vector<8xf32> to vector<8x1xf32>
    %18 = vector.broadcast %17 : vector<8x1xf32> to vector<8x16xf32>
    %19 = arith.subf %15, %18 : vector<8x16xf32>
    %20 = math.exp %19 : vector<8x16xf32>
    %cst_13 = arith.constant dense<0.000000e+00> : vector<8xf32>
    %21 = vector.multi_reduction <add>, %20, %cst_13 [1] : vector<8x16xf32> to vector<8xf32>
    %22 = vector.shape_cast %21 : vector<8xf32> to vector<8x1xf32>
    %23 = tpu.reciprocal %22 : vector<8x1xf32> -> vector<8x1xf32>
    %24 = vector.broadcast %23 : vector<8x1xf32> to vector<8x16xf32>
    %25 = arith.mulf %20, %24 : vector<8x16xf32>
    %c0_14 = arith.constant 0 : index
    %c0_15 = arith.constant 0 : index
    %26 = vector.load %arg6[%c0_14, %c0_15] : memref<8x16xf32, #tpu.memory_space<vmem>>, vector<8x16xf32>
    tpu.vector_store %arg6[%c0_14, %c0_15], %25 {strides = array<i32>} : memref<8x16xf32, #tpu.memory_space<vmem>>, vector<8x16xf32>,
    return
  }
  func.func @transform_0(%arg0: i32) -> (i32, i32) {
    %c0_i32 = arith.constant 0 : i32
    %c0_i32_0 = arith.constant 0 : i32
    return %arg0, %c0_i32 : i32, i32
  }
  func.func @transform_1(%arg0: i32) -> (i32, i32) {
    %c0_i32 = arith.constant 0 : i32
    %c0_i32_0 = arith.constant 0 : i32
    %c0_i32_1 = arith.constant 0 : i32
    return %c0_i32, %c0_i32_0 : i32, i32
  }
  func.func @transform_2(%arg0: i32) -> (i32, i32) {
    %c0_i32 = arith.constant 0 : i32
    %c0_i32_0 = arith.constant 0 : i32
    %c0_i32_1 = arith.constant 0 : i32
    return %c0_i32, %c0_i32_0 : i32, i32
  }
  func.func @transform_3(%arg0: i32) -> (i32, i32) {
    %c0_i32 = arith.constant 0 : i32
    %c0_i32_0 = arith.constant 0 : i32
    %c0_i32_1 = arith.constant 0 : i32
    return %c0_i32, %c0_i32_0 : i32, i32
  }
  func.func @transform_4(%arg0: i32) -> (i32, i32) {
    %c0_i32 = arith.constant 0 : i32
    %c0_i32_0 = arith.constant 0 : i32
    %c0_i32_1 = arith.constant 0 : i32
    return %c0_i32, %c0_i32_0 : i32, i32
  }
  func.func @transform_5(%arg0: i32) -> (i32, i32) {
    %c0_i32 = arith.constant 0 : i32
    %c0_i32_0 = arith.constant 0 : i32
    return %arg0, %c0_i32 : i32, i32
  }
}

</mosaic_0001>

<llo_original>
// kernel: cab3d_forward.1
$region0: #{cab3d_forward.1}
  #allocation0 [shape = 'u32[]', space=smem, size = 0x4, offset = 0x4, fixed_abs, tag = 'smem constant byte address 0x4 - core index']
  #allocation1 [shape = 'u32[144,128]{1,0:T(1,128)}', space=vmem, size = 0x12000, scoped, tag = 'internal scratch']
  %s0 = inlined_call_operand.vmem [shape: f32[10,16], index: 0, kind: input, shape index: {}]
  %s1 = inlined_call_operand.vmem [shape: f32[16,8], index: 1, kind: input, shape index: {}]
  %s2 = inlined_call_operand.vmem [shape: f32[1,8], index: 2, kind: input, shape index: {}]
  %s3 = inlined_call_operand.vmem [shape: f32[8,16], index: 3, kind: input, shape index: {}]
  %s4 = inlined_call_operand.vmem [shape: f32[1,16], index: 4, kind: input, shape index: {}]
  %s5 = inlined_call_operand.vmem [shape: f32[10,16], index: 5, kind: output, shape index: {}]
  %s6 = sld [smem:[#allocation0]]
  $region53: #{cab3d_forward.1} parent=0
    _
  %s8 = ssub.s32 1, %s6
  %s9 = scalar_select 0, %s8, %s6
  loop: start=0, step=1, limit=4
  $region2: #{cab3d_forward.1} parent=0 // loop_pre_header
    _
  $region3: #{cab3d_forward.1} parent=0 // loop_header
    %s11 = sphi 0, %s15
    %p12 = scmp.ge.s32.totalorder %s11, 4
    %s21 = sphi 0, %s23
    %s24 = sphi 0, %s21
    %s25 = sphi 0, %s24
    %s41 = sphi 0, %s25
    %s45 = sphi 0, %s45
    %s47 = sphi 0, %s45
    %s48 = sphi 0, %s47
    %s62 = sphi 0, %s48
    %s66 = sphi 0, %s66
    %s68 = sphi 0, %s66
    %s69 = sphi 0, %s68
    %s83 = sphi 0, %s69
    %s87 = sphi 0, %s87
    %s89 = sphi 0, %s87
    %s90 = sphi 0, %s89
    %s104 = sphi 0, %s90
    %s108 = sphi 0, %s108
    %s110 = sphi 0, %s108
    %s111 = sphi 0, %s110
    %s125 = sphi 0, %s111
    %s131 = sphi 0, %s133
    %s134 = sphi 0, %s131
    %s135 = sphi 0, %s134
    %s151 = sphi 0, %s135
  $region4: #{cab3d_forward.1} parent=0 // loop_header_branch
    %14 = sbr.rel (%p12) target = $region8
  $region5: #{cab3d_forward.1} parent=0 // loop_body
    %s16 = ssub.s32 %s11, 1
    %s17 = ssub.s32 %s11, 2
    %s18 = sadd.s32 %s11, 1
    %s19 = ssub.s32 %s11, %s18
    %p20 = scmp.eq.s32.totalorder %s19, 0
    %s22 = sadd.s32 %s21, 1
    %s23 = scalar_select %p20, %s21, %s22
    %p26 = pneg %p20
    %p27 = scmp.eq.s32.totalorder %s11, 1
    %p28 = por %p26, %p27
    %p29 = scmp.ne.s32.totalorder %s21, %s24
    %p30 = scmp.eq.s32.totalorder %s11, 0
    %p31 = por %p29, %p30
    %p32 = scmp.ne.s32.totalorder %s21, %s24
    %p33 = scmp.eq.s32.totalorder %s16, 1
    %p34 = por %p32, %p33
    %p35 = scmp.ne.s32.totalorder %s24, %s25
    %p36 = scmp.eq.s32.totalorder %s16, 0
    %p37 = por %p35, %p36
    %p38 = scmp.ne.s32.totalorder %s24, %s25
    %p39 = scmp.eq.s32.totalorder %s17, 1
    %p40 = por %p38, %p39
    %p42 = scmp.ne.s32.totalorder %s25, %s41
    %p43 = scmp.eq.s32.totalorder %s17, 0
    %p44 = por %p42, %p43
    %s46 = sadd.s32 %s45, 1
    %p49 = scmp.eq.s32.totalorder %s11, 1
    %p50 = scmp.ne.s32.totalorder %s45, %s47
    %p51 = scmp.eq.s32.totalorder %s11, 0
    %p52 = por %p50, %p51
    %p53 = scmp.ne.s32.totalorder %s45, %s47
    %p54 = scmp.eq.s32.totalorder %s16, 1
    %p55 = por %p53, %p54
    %p56 = scmp.ne.s32.totalorder %s47, %s48
    %p57 = scmp.eq.s32.totalorder %s16, 0
    %p58 = por %p56, %p57
    %p59 = scmp.ne.s32.totalorder %s47, %s48
    %p60 = scmp.eq.s32.totalorder %s17, 1
    %p61 = por %p59, %p60
    %p63 = scmp.ne.s32.totalorder %s48, %s62
    %p64 = scmp.eq.s32.totalorder %s17, 0
    %p65 = por %p63, %p64
    %s67 = sadd.s32 %s66, 1
    %p70 = scmp.eq.s32.totalorder %s11, 1
    %p71 = scmp.ne.s32.totalorder %s66, %s68
    %p72 = scmp.eq.s32.totalorder %s11, 0
    %p73 = por %p71, %p72
    %p74 = scmp.ne.s32.totalorder %s66, %s68
    %p75 = scmp.eq.s32.totalorder %s16, 1
    %p76 = por %p74, %p75
    %p77 = scmp.ne.s32.totalorder %s68, %s69
    %p78 = scmp.eq.s32.totalorder %s16, 0
    %p79 = por %p77, %p78
    %p80 = scmp.ne.s32.totalorder %s68, %s69
    %p81 = scmp.eq.s32.totalorder %s17, 1
    %p82 = por %p80, %p81
    %p84 = scmp.ne.s32.totalorder %s69, %s83
    %p85 = scmp.eq.s32.totalorder %s17, 0
    %p86 = por %p84, %p85
    %s88 = sadd.s32 %s87, 1
    %p91 = scmp.eq.s32.totalorder %s11, 1
    %p92 = scmp.ne.s32.totalorder %s87, %s89
    %p93 = scmp.eq.s32.totalorder %s11, 0
    %p94 = por %p92, %p93
    %p95 = scmp.ne.s32.totalorder %s87, %s89
    %p96 = scmp.eq.s32.totalorder %s16, 1
    %p97 = por %p95, %p96
    %p98 = scmp.ne.s32.totalorder %s89, %s90
    %p99 = scmp.eq.s32.totalorder %s16, 0
    %p100 = por %p98, %p99
    %p101 = scmp.ne.s32.totalorder %s89, %s90
    %p102 = scmp.eq.s32.totalorder %s17, 1
    %p103 = por %p101, %p102
    %p105 = scmp.ne.s32.totalorder %s90, %s104
    %p106 = scmp.eq.s32.totalorder %s17, 0
    %p107 = por %p105, %p106
    %s109 = sadd.s32 %s108, 1
    %p112 = scmp.eq.s32.totalorder %s11, 1
    %p113 = scmp.ne.s32.totalorder %s108, %s110
    %p114 = scmp.eq.s32.totalorder %s11, 0
    %p115 = por %p113, %p114
    %p116 = scmp.ne.s32.totalorder %s108, %s110
    %p117 = scmp.eq.s32.totalorder %s16, 1
    %p118 = por %p116, %p117
    %p119 = scmp.ne.s32.totalorder %s110, %s111
    %p120 = scmp.eq.s32.totalorder %s16, 0
    %p121 = por %p119, %p120
    %p122 = scmp.ne.s32.totalorder %s110, %s111
    %p123 = scmp.eq.s32.totalorder %s17, 1
    %p124 = por %p122, %p123
    %p126 = scmp.ne.s32.totalorder %s111, %s125
    %p127 = scmp.eq.s32.totalorder %s17, 0
    %p128 = por %p126, %p127
    %s129 = ssub.s32 %s11, %s18
    %p130 = scmp.eq.s32.totalorder %s129, 0
    %s132 = sadd.s32 %s131, 1
    %s133 = scalar_select %p130, %s131, %s132
    %p136 = pneg %p130
    %p137 = scmp.eq.s32.totalorder %s11, 1
    %p138 = por %p136, %p137
    %p139 = scmp.ne.s32.totalorder %s131, %s134
    %p140 = scmp.eq.s32.totalorder %s11, 0
    %p141 = por %p139, %p140
    %p142 = scmp.ne.s32.totalorder %s131, %s134
    %p143 = scmp.eq.s32.totalorder %s16, 1
    %p144 = por %p142, %p143
    %p145 = scmp.ne.s32.totalorder %s134, %s135
    %p146 = scmp.eq.s32.totalorder %s16, 0
    %p147 = por %p145, %p146
    %p148 = scmp.ne.s32.totalorder %s134, %s135
    %p149 = scmp.eq.s32.totalorder %s17, 1
    %p150 = por %p148, %p149
    %p152 = scmp.ne.s32.totalorder %s135, %s151
    %p153 = scmp.eq.s32.totalorder %s17, 0
    %p154 = por %p152, %p153
    %p155 = scmp.le.s32.totalorder 1, %s11
    %p156 = scmp.lt.s32.totalorder %s11, 3
    %p157 = pnand %p155, %p156
    %p158 = pneg %p157
    // Predicated region
    $region9: #{cab3d_forward.1} parent=5 // pred_check
      _
    $region10: #{cab3d_forward.1} parent=5 // pred_check_branch
      %160 = sbr.rel (%p157) target = $region12
    $region11: #{cab3d_forward.1} parent=5 // pred_region
      %s161 = ssub.s32 %s11, 1
      // Predicated region
      $region13: #{cab3d_forward.1} parent=11 // pred_check
        %p162 = pneg %p58
      $region14: #{cab3d_forward.1} parent=11 // pred_check_branch
        %164 = sbr.rel (%p162) target = $region16
      $region15: #{cab3d_forward.1} parent=11 // pred_region
        _
      $region16: #{cab3d_forward.1} parent=11 // pred_fallthru
        _
      // Predicated region
      $region17: #{cab3d_forward.1} parent=11 // pred_check
        %p165 = pneg %p79
      $region18: #{cab3d_forward.1} parent=11 // pred_check_branch
        %167 = sbr.rel (%p165) target = $region20
      $region19: #{cab3d_forward.1} parent=11 // pred_region
        _
      $region20: #{cab3d_forward.1} parent=11 // pred_fallthru
        _
      // Predicated region
      $region21: #{cab3d_forward.1} parent=11 // pred_check
        %p168 = pneg %p100
      $region22: #{cab3d_forward.1} parent=11 // pred_check_branch
        %170 = sbr.rel (%p168) target = $region24
      $region23: #{cab3d_forward.1} parent=11 // pred_region
        _
      $region24: #{cab3d_forward.1} parent=11 // pred_fallthru
        _
      // Predicated region
      $region25: #{cab3d_forward.1} parent=11 // pred_check
        %p171 = pneg %p121
      $region26: #{cab3d_forward.1} parent=11 // pred_check_branch
        %173 = sbr.rel (%p171) target = $region28
      $region27: #{cab3d_forward.1} parent=11 // pred_region
        _
      $region28: #{cab3d_forward.1} parent=11 // pred_fallthru
        _
    $region12: #{cab3d_forward.1} parent=5 // pred_fallthru
      _
    %p174 = scmp.lt.s32.totalorder %s11, 2
    // Predicated region
    $region29: #{cab3d_forward.1} parent=5 // pred_check
      %p175 = pneg %p174
    $region30: #{cab3d_forward.1} parent=5 // pred_check_branch
      %177 = sbr.rel (%p175) target = $region32
    $region31: #{cab3d_forward.1} parent=5 // pred_region
      // Predicated region
      $region33: #{cab3d_forward.1} parent=31 // pred_check
        %p178 = pneg %p31
      $region34: #{cab3d_forward.1} parent=31 // pred_check_branch
        %180 = sbr.rel (%p178) target = $region36
      $region35: #{cab3d_forward.1} parent=31 // pred_region
        %p181 = scmp.lt.s32.totalorder %s11, 1
        %s182 = scalar_select %p181, %s11, 1
        %s183 = smul.addr %s182, 8
        %s184 = scalar_lea.vmem %s0, %s183
      $region36: #{cab3d_forward.1} parent=31 // pred_fallthru
        _
    $region32: #{cab3d_forward.1} parent=5 // pred_fallthru
      _
    %p185 = scmp.le.s32.totalorder 1, %s11
    %p186 = scmp.lt.s32.totalorder %s11, 3
    %p187 = pnand %p185, %p186
    %p188 = pneg %p187
    // Predicated region
    $region37: #{cab3d_forward.1} parent=5 // pred_check
      _
    $region38: #{cab3d_forward.1} parent=5 // pred_check_branch
      %190 = sbr.rel (%p187) target = $region40
    $region39: #{cab3d_forward.1} parent=5 // pred_region
      %s191 = ssub.s32 %s11, 1
      %p192 = scmp.lt.s32.totalorder %s16, 1
      %s193 = scalar_select %p192, %s16, 1
      %s194 = smul.addr %s193, 8
      %s195 = scalar_lea.vmem %s0, %s194
      %p196 = pneg %p37
      %p197 = pneg %p34
      %p198 = pneg %p58
      %p199 = pneg %p55
      %p200 = pneg %p79
      %p201 = pneg %p76
      %p202 = pneg %p100
      %p203 = pneg %p97
      %p204 = pneg %p121
      %p205 = pneg %p118
      %p206 = pneg %p147
      %p207 = pneg %p144
      %p208 = scmp.lt.s32.totalorder %s16, 1
      %s209 = scalar_select %p208, %s16, 1
      %s210 = smul.addr %s209, 8
      %s211 = scalar_lea.vmem %s5, %s210
      %p212 = scmp.lt.s32.totalorder %s16, 1
      %s213 = scalar_select %p212, %s16, 1
      %s214 = smul.addr %s213, 8
      %s215 = scalar_lea.vmem %s0, %s214
      %p216 = scmp.lt.s32.totalorder %s16, 1
      %s217 = scalar_select %p216, %s16, 1
      %s218 = smul.addr %s217, 8
      %s219 = scalar_lea.vmem %s5, %s218
      %v220 = vld [vmem:[%s215] sm:$0xff]
      %v221 = vld [vmem:[%s1] sm:$0xff]
      %v222 = vld [vmem:[%s1 + $0x8] sm:$0xff]
      %v223 = vld [vmem:[%s2] sm:$0x1]
      %v225 = vlaneseq
      %v226 = vshrl.u32 %v225, 7
      %v227 = vsub.s32 0, %v226
      %v228 = vrot.slane %v223, %v227
      %vm230 = vcmask 130048
      %v232 = vsel %vm230, %v220, 0
      %234 = vmatprep.subr.mxu0 0.0
      %v235 = vand.u32 %v221, 4294901760
      %236 = vmatpush1.msra.mxu0 %v235
      %237 = vmatprep.subr.mxu0 0.0
      %v238 = vand.u32 %v222, 4294901760
      %239 = vmatpush1.msra.mxu0 %v238
      %240 = vmatprep.subr.mxu0 0.0
      %241 = vmatpush1.msra.mxu0 0.0
      %242 = vmatprep.subr.mxu0 0.0
      %243 = vmatpush1.msra.mxu0 0.0
      %244 = vmatprep.subr.mxu0 0.0
      %245 = vmatpush1.msra.mxu0 0.0
      %246 = vmatprep.subr.mxu0 0.0
      %247 = vmatpush1.msra.mxu0 0.0
      %248 = vmatprep.subr.mxu0 0.0
      %249 = vmatpush1.msra.mxu0 0.0
      %250 = vmatprep.subr.mxu0 0.0
      %251 = vmatpush1.msra.mxu0 0.0
      %252 = vmatprep.subr.mxu0 0.0
      %253 = vmatpush1.msra.mxu0 0.0
      %254 = vmatprep.subr.mxu0 0.0
      %255 = vmatpush1.msra.mxu0 0.0
      %256 = vmatprep.subr.mxu0 0.0
      %257 = vmatpush1.msra.mxu0 0.0
      %258 = vmatprep.subr.mxu0 0.0
      %259 = vmatpush1.msra.mxu0 0.0
      %260 = vmatprep.subr.mxu0 0.0
      %261 = vmatpush1.msra.mxu0 0.0
      %262 = vmatprep.subr.mxu0 0.0
      %263 = vmatpush1.msra.mxu0 0.0
      %264 = vmatprep.subr.mxu0 0.0
      %265 = vmatpush1.msra.mxu0 0.0
      %266 = vmatprep.subr.mxu0 0.0
      %267 = vmatpush1.msra.mxu0 0.0
      %268 = vmatprep.subr.mxu0 0.0
      %269 = vmatpush1.msra.mxu0 0.0
      %270 = vmatprep.subr.mxu0 0.0
      %271 = vmatpush1.msra.mxu0 0.0
      %272 = vmatprep.subr.mxu0 0.0
      %273 = vmatpush1.msra.mxu0 0.0
      %274 = vmatprep.subr.mxu0 0.0
      %275 = vmatpush1.msra.mxu0 0.0
      %276 = vmatprep.subr.mxu0 0.0
      %277 = vmatpush1.msra.mxu0 0.0
      %278 = vmatprep.subr.mxu0 0.0
      %279 = vmatpush1.msra.mxu0 0.0
      %280 = vmatprep.subr.mxu0 0.0
      %281 = vmatpush1.msra.mxu0 0.0
      %282 = vmatprep.subr.mxu0 0.0
      %283 = vmatpush1.msra.mxu0 0.0
      %284 = vmatprep.subr.mxu0 0.0
      %285 = vmatpush1.msra.mxu0 0.0
      %286 = vmatprep.subr.mxu0 0.0
      %287 = vmatpush1.msra.mxu0 0.0
      %288 = vmatprep.subr.mxu0 0.0
      %289 = vmatpush1.msra.mxu0 0.0
      %290 = vmatprep.subr.mxu0 0.0
      %291 = vmatpush1.msra.mxu0 0.0
      %292 = vmatprep.subr.mxu0 0.0
      %293 = vmatpush1.msra.mxu0 0.0
      %294 = vmatprep.subr.mxu0 0.0
      %295 = vmatpush1.msra.mxu0 0.0
      %296 = vmatprep.subr.mxu0 0.0
      %297 = vmatpush1.msra.mxu0 0.0
      %298 = vmatprep.subr.mxu0 0.0
      %299 = vmatpush1.msra.mxu0 0.0
      %300 = vmatprep.mubr.f32.mxu0 0.0
      %v301 = vand.u32 %v232, 4294901760
      %v302 = vsub.f32 %v232, %v301
      %v303 = vand.u32 %v302, 4294901760
      %v304 = vsub.f32 %v302, %v303
      %v305 = vand.u32 %v304, 4294901760
      %306 = vmatmul.mubr.f32.gmra.mrb[0].mxu0 %v305
      %v307 = vpop.f32.mrb[0].mxu0
      %v308 = vadd.f32 %v228, %v307
      %v309 = vpop.f32.mrb[0].mxu0
      %310 = vdwg.mxu0
      %311 = vmatprep.subr.mxu0 0.0
      %v312 = vand.u32 %v221, 4294901760
      %v313 = vsub.f32 %v221, %v312
      %v314 = vand.u32 %v313, 4294901760
      %v315 = vsub.f32 %v313, %v314
      %v316 = vand.u32 %v315, 4294901760
      %317 = vmatpush1.msra.mxu0 %v316
      %318 = vmatprep.subr.mxu0 0.0
      %v319 = vand.u32 %v222, 4294901760
      %v320 = vsub.f32 %v222, %v319
      %v321 = vand.u32 %v320, 4294901760
      %v322 = vsub.f32 %v320, %v321
      %v323 = vand.u32 %v322, 4294901760
      %324 = vmatpush1.msra.mxu0 %v323
      %325 = vmatprep.subr.mxu0 0.0
      %326 = vmatpush1.msra.mxu0 0.0
      %327 = vmatprep.subr.mxu0 0.0
      %328 = vmatpush1.msra.mxu0 0.0
      %329 = vmatprep.subr.mxu0 0.0
      %330 = vmatpush1.msra.mxu0 0.0
      %331 = vmatprep.subr.mxu0 0.0
      %332 = vmatpush1.msra.mxu0 0.0
      %333 = vmatprep.subr.mxu0 0.0
      %334 = vmatpush1.msra.mxu0 0.0
      %335 = vmatprep.subr.mxu0 0.0
      %336 = vmatpush1.msra.mxu0 0.0
      %337 = vmatprep.subr.mxu0 0.0
      %338 = vmatpush1.msra.mxu0 0.0
      %339 = vmatprep.subr.mxu0 0.0
      %340 = vmatpush1.msra.mxu0 0.0
      %341 = vmatprep.subr.mxu0 0.0
      %342 = vmatpush1.msra.mxu0 0.0
      %343 = vmatprep.subr.mxu0 0.0
      %344 = vmatpush1.msra.mxu0 0.0
      %345 = vmatprep.subr.mxu0 0.0
      %346 = vmatpush1.msra.mxu0 0.0
      %347 = vmatprep.subr.mxu0 0.0
      %348 = vmatpush1.msra.mxu0 0.0
      %349 = vmatprep.subr.mxu0 0.0
      %350 = vmatpush1.msra.mxu0 0.0
      %351 = vmatprep.subr.mxu0 0.0
      %352 = vmatpush1.msra.mxu0 0.0
      %353 = vmatprep.subr.mxu0 0.0
      %354 = vmatpush1.msra.mxu0 0.0
      %355 = vmatprep.subr.mxu0 0.0
      %356 = vmatpush1.msra.mxu0 0.0
      %357 = vmatprep.subr.mxu0 0.0
      %358 = vmatpush1.msra.mxu0 0.0
      %359 = vmatprep.subr.mxu0 0.0
      %360 = vmatpush1.msra.mxu0 0.0
      %361 = vmatprep.subr.mxu0 0.0
      %362 = vmatpush1.msra.mxu0 0.0
      %363 = vmatprep.subr.mxu0 0.0
      %364 = vmatpush1.msra.mxu0 0.0
      %365 = vmatprep.subr.mxu0 0.0
      %366 = vmatpush1.msra.mxu0 0.0
      %367 = vmatprep.subr.mxu0 0.0
      %368 = vmatpush1.msra.mxu0 0.0
      %369 = vmatprep.subr.mxu0 0.0
      %370 = vmatpush1.msra.mxu0 0.0
      %371 = vmatprep.subr.mxu0 0.0
      %372 = vmatpush1.msra.mxu0 0.0
      %373 = vmatprep.subr.mxu0 0.0
      %374 = vmatpush1.msra.mxu0 0.0
      %375 = vmatprep.subr.mxu0 0.0
      %376 = vmatpush1.msra.mxu0 0.0
      %377 = vmatprep.subr.mxu0 0.0
      %378 = vmatpush1.msra.mxu0 0.0
      %379 = vmatprep.subr.mxu0 0.0
      %380 = vmatpush1.msra.mxu0 0.0
      %381 = vmatprep.subr.mxu0 0.0
      %382 = vmatpush1.msra.mxu0 0.0
      %383 = vmatprep.subr.mxu0 0.0
      %384 = vmatpush1.msra.mxu0 0.0
      %385 = vmatprep.mubr.f32.mxu0 0.0
      %v386 = vand.u32 %v232, 4294901760
      %387 = vmatmul.mubr.f32.gmra.mrb[0].mxu0 %v386
      %v388 = vpop.f32.mrb[0].mxu0
      %v389 = vadd.f32 %v308, %v388
      %v390 = vpop.f32.mrb[0].mxu0
      %391 = vdwg.mxu0
      %392 = vmatprep.subr.mxu0 0.0
      %v393 = vand.u32 %v221, 4294901760
      %v394 = vsub.f32 %v221, %v393
      %395 = vmatpush1.msra.mxu0 %v394
      %396 = vmatprep.subr.mxu0 0.0
      %v397 = vand.u32 %v222, 4294901760
      %v398 = vsub.f32 %v222, %v397
      %399 = vmatpush1.msra.mxu0 %v398
      %400 = vmatprep.subr.mxu0 0.0
      %401 = vmatpush1.msra.mxu0 0.0
      %402 = vmatprep.subr.mxu0 0.0
      %403 = vmatpush1.msra.mxu0 0.0
      %404 = vmatprep.subr.mxu0 0.0
      %405 = vmatpush1.msra.mxu0 0.0
      %406 = vmatprep.subr.mxu0 0.0
      %407 = vmatpush1.msra.mxu0 0.0
      %408 = vmatprep.subr.mxu0 0.0
      %409 = vmatpush1.msra.mxu0 0.0
      %410 = vmatprep.subr.mxu0 0.0
      %411 = vmatpush1.msra.mxu0 0.0
      %412 = vmatprep.subr.mxu0 0.0
      %413 = vmatpush1.msra.mxu0 0.0
      %414 = vmatprep.subr.mxu0 0.0
      %415 = vmatpush1.msra.mxu0 0.0
      %416 = vmatprep.subr.mxu0 0.0
      %417 = vmatpush1.msra.mxu0 0.0
      %418 = vmatprep.subr.mxu0 0.0
      %419 = vmatpush1.msra.mxu0 0.0
      %420 = vmatprep.subr.mxu0 0.0
      %421 = vmatpush1.msra.mxu0 0.0
      %422 = vmatprep.subr.mxu0 0.0
      %423 = vmatpush1.msra.mxu0 0.0
      %424 = vmatprep.subr.mxu0 0.0
      %425 = vmatpush1.msra.mxu0 0.0
      %426 = vmatprep.subr.mxu0 0.0
      %427 = vmatpush1.msra.mxu0 0.0
      %428 = vmatprep.subr.mxu0 0.0
      %429 = vmatpush1.msra.mxu0 0.0
      %430 = vmatprep.subr.mxu0 0.0
      %431 = vmatpush1.msra.mxu0 0.0
      %432 = vmatprep.subr.mxu0 0.0
      %433 = vmatpush1.msra.mxu0 0.0
      %434 = vmatprep.subr.mxu0 0.0
      %435 = vmatpush1.msra.mxu0 0.0
      %436 = vmatprep.subr.mxu0 0.0
      %437 = vmatpush1.msra.mxu0 0.0
      %438 = vmatprep.subr.mxu0 0.0
      %439 = vmatpush1.msra.mxu0 0.0
      %440 = vmatprep.subr.mxu0 0.0
      %441 = vmatpush1.msra.mxu0 0.0
      %442 = vmatprep.subr.mxu0 0.0
      %443 = vmatpush1.msra.mxu0 0.0
      %444 = vmatprep.subr.mxu0 0.0
      %445 = vmatpush1.msra.mxu0 0.0
      %446 = vmatprep.subr.mxu0 0.0
      %447 = vmatpush1.msra.mxu0 0.0
      %448 = vmatprep.subr.mxu0 0.0
      %449 = vmatpush1.msra.mxu0 0.0
      %450 = vmatprep.subr.mxu0 0.0
      %451 = vmatpush1.msra.mxu0 0.0
      %452 = vmatprep.subr.mxu0 0.0
      %453 = vmatpush1.msra.mxu0 0.0
      %454 = vmatprep.subr.mxu0 0.0
      %455 = vmatpush1.msra.mxu0 0.0
      %456 = vmatprep.subr.mxu0 0.0
      %457 = vmatpush1.msra.mxu0 0.0
      %458 = vmatprep.subr.mxu0 0.0
      %459 = vmatpush1.msra.mxu0 0.0
      %460 = vmatprep.mubr.f32.mxu0 0.0
      %v461 = vand.u32 %v232, 4294901760
      %v462 = vsub.f32 %v232, %v461
      %463 = vmatmul.mubr.f32.gmra.mrb[0].mxu0 %v462
      %v464 = vpop.f32.mrb[0].mxu0
      %v465 = vadd.f32 %v389, %v464
      %v466 = vpop.f32.mrb[0].mxu0
      %467 = vdwg.mxu0
      %468 = vmatprep.subr.mxu0 0.0
      %v469 = vand.u32 %v221, 4294901760
      %470 = vmatpush1.msra.mxu0 %v469
      %471 = vmatprep.subr.mxu0 0.0
      %v472 = vand.u32 %v222, 4294901760
      %473 = vmatpush1.msra.mxu0 %v472
      %474 = vmatprep.subr.mxu0 0.0
      %475 = vmatpush1.msra.mxu0 0.0
      %476 = vmatprep.subr.mxu0 0.0
      %477 = vmatpush1.msra.mxu0 0.0
      %478 = vmatprep.subr.mxu0 0.0
      %479 = vmatpush1.msra.mxu0 0.0
      %480 = vmatprep.subr.mxu0 0.0
      %481 = vmatpush1.msra.mxu0 0.0
      %482 = vmatprep.subr.mxu0 0.0
      %483 = vmatpush1.msra.mxu0 0.0
      %484 = vmatprep.subr.mxu0 0.0
      %485 = vmatpush1.msra.mxu0 0.0
      %486 = vmatprep.subr.mxu0 0.0
      %487 = vmatpush1.msra.mxu0 0.0
      %488 = vmatprep.subr.mxu0 0.0
      %489 = vmatpush1.msra.mxu0 0.0
      %490 = vmatprep.subr.mxu0 0.0
      %491 = vmatpush1.msra.mxu0 0.0
      %492 = vmatprep.subr.mxu0 0.0
      %493 = vmatpush1.msra.mxu0 0.0
      %494 = vmatprep.subr.mxu0 0.0
      %495 = vmatpush1.msra.mxu0 0.0
      %496 = vmatprep.subr.mxu0 0.0
      %497 = vmatpush1.msra.mxu0 0.0
      %498 = vmatprep.subr.mxu0 0.0
      %499 = vmatpush1.msra.mxu0 0.0
      %500 = vmatprep.subr.mxu0 0.0
      %501 = vmatpush1.msra.mxu0 0.0
      %502 = vmatprep.subr.mxu0 0.0
      %503 = vmatpush1.msra.mxu0 0.0
      %504 = vmatprep.subr.mxu0 0.0
      %505 = vmatpush1.msra.mxu0 0.0
      %506 = vmatprep.subr.mxu0 0.0
      %507 = vmatpush1.msra.mxu0 0.0
      %508 = vmatprep.subr.mxu0 0.0
      %509 = vmatpush1.msra.mxu0 0.0
      %510 = vmatprep.subr.mxu0 0.0
      %511 = vmatpush1.msra.mxu0 0.0
      %512 = vmatprep.subr.mxu0 0.0
      %513 = vmatpush1.msra.mxu0 0.0
      %514 = vmatprep.subr.mxu0 0.0
      %515 = vmatpush1.msra.mxu0 0.0
      %516 = vmatprep.subr.mxu0 0.0
      %517 = vmatpush1.msra.mxu0 0.0
      %518 = vmatprep.subr.mxu0 0.0
      %519 = vmatpush1.msra.mxu0 0.0
      %520 = vmatprep.subr.mxu0 0.0
      %521 = vmatpush1.msra.mxu0 0.0
      %522 = vmatprep.subr.mxu0 0.0
      %523 = vmatpush1.msra.mxu0 0.0
      %524 = vmatprep.subr.mxu0 0.0
      %525 = vmatpush1.msra.mxu0 0.0
      %526 = vmatprep.subr.mxu0 0.0
      %527 = vmatpush1.msra.mxu0 0.0
      %528 = vmatprep.subr.mxu0 0.0
      %529 = vmatpush1.msra.mxu0 0.0
      %530 = vmatprep.subr.mxu0 0.0
      %531 = vmatpush1.msra.mxu0 0.0
      %532 = vmatprep.subr.mxu0 0.0
      %533 = vmatpush1.msra.mxu0 0.0
      %534 = vmatprep.mubr.f32.mxu0 0.0
      %v535 = vand.u32 %v232, 4294901760
      %v536 = vsub.f32 %v232, %v535
      %v537 = vand.u32 %v536, 4294901760
      %538 = vmatmul.mubr.f32.gmra.mrb[0].mxu0 %v537
      %v539 = vpop.f32.mrb[0].mxu0
      %v540 = vadd.f32 %v465, %v539
      %v541 = vpop.f32.mrb[0].mxu0
      %542 = vdwg.mxu0
      %543 = vmatprep.subr.mxu0 0.0
      %v544 = vand.u32 %v221, 4294901760
      %v545 = vsub.f32 %v221, %v544
      %v546 = vand.u32 %v545, 4294901760
      %547 = vmatpush1.msra.mxu0 %v546
      %548 = vmatprep.subr.mxu0 0.0
      %v549 = vand.u32 %v222, 4294901760
      %v550 = vsub.f32 %v222, %v549
      %v551 = vand.u32 %v550, 4294901760
      %552 = vmatpush1.msra.mxu0 %v551
      %553 = vmatprep.subr.mxu0 0.0
      %554 = vmatpush1.msra.mxu0 0.0
      %555 = vmatprep.subr.mxu0 0.0
      %556 = vmatpush1.msra.mxu0 0.0
      %557 = vmatprep.subr.mxu0 0.0
      %558 = vmatpush1.msra.mxu0 0.0
      %559 = vmatprep.subr.mxu0 0.0
      %560 = vmatpush1.msra.mxu0 0.0
      %561 = vmatprep.subr.mxu0 0.0
      %562 = vmatpush1.msra.mxu0 0.0
      %563 = vmatprep.subr.mxu0 0.0
      %564 = vmatpush1.msra.mxu0 0.0
      %565 = vmatprep.subr.mxu0 0.0
      %566 = vmatpush1.msra.mxu0 0.0
      %567 = vmatprep.subr.mxu0 0.0
      %568 = vmatpush1.msra.mxu0 0.0
      %569 = vmatprep.subr.mxu0 0.0
      %570 = vmatpush1.msra.mxu0 0.0
      %571 = vmatprep.subr.mxu0 0.0
      %572 = vmatpush1.msra.mxu0 0.0
      %573 = vmatprep.subr.mxu0 0.0
      %574 = vmatpush1.msra.mxu0 0.0
      %575 = vmatprep.subr.mxu0 0.0
      %576 = vmatpush1.msra.mxu0 0.0
      %577 = vmatprep.subr.mxu0 0.0
      %578 = vmatpush1.msra.mxu0 0.0
      %579 = vmatprep.subr.mxu0 0.0
      %580 = vmatpush1.msra.mxu0 0.0
      %581 = vmatprep.subr.mxu0 0.0
      %582 = vmatpush1.msra.mxu0 0.0
      %583 = vmatprep.subr.mxu0 0.0
      %584 = vmatpush1.msra.mxu0 0.0
      %585 = vmatprep.subr.mxu0 0.0
      %586 = vmatpush1.msra.mxu0 0.0
      %587 = vmatprep.subr.mxu0 0.0
      %588 = vmatpush1.msra.mxu0 0.0
      %589 = vmatprep.subr.mxu0 0.0
      %590 = vmatpush1.msra.mxu0 0.0
      %591 = vmatprep.subr.mxu0 0.0
      %592 = vmatpush1.msra.mxu0 0.0
      %593 = vmatprep.subr.mxu0 0.0
      %594 = vmatpush1.msra.mxu0 0.0
      %595 = vmatprep.subr.mxu0 0.0
      %596 = vmatpush1.msra.mxu0 0.0
      %597 = vmatprep.subr.mxu0 0.0
      %598 = vmatpush1.msra.mxu0 0.0
      %599 = vmatprep.subr.mxu0 0.0
      %600 = vmatpush1.msra.mxu0 0.0
      %601 = vmatprep.subr.mxu0 0.0
      %602 = vmatpush1.msra.mxu0 0.0
      %603 = vmatprep.subr.mxu0 0.0
      %604 = vmatpush1.msra.mxu0 0.0
      %605 = vmatprep.subr.mxu0 0.0
      %606 = vmatpush1.msra.mxu0 0.0
      %607 = vmatprep.subr.mxu0 0.0
      %608 = vmatpush1.msra.mxu0 0.0
      %609 = vmatprep.subr.mxu0 0.0
      %610 = vmatpush1.msra.mxu0 0.0
      %611 = vmatprep.subr.mxu0 0.0
      %612 = vmatpush1.msra.mxu0 0.0
      %613 = vmatprep.mubr.f32.mxu0 0.0
      %v614 = vand.u32 %v232, 4294901760
      %615 = vmatmul.mubr.f32.gmra.mrb[0].mxu0 %v614
      %v616 = vpop.f32.mrb[0].mxu0
      %v617 = vadd.f32 %v540, %v616
      %v618 = vpop.f32.mrb[0].mxu0
      %619 = vdwg.mxu0
      %620 = vmatprep.subr.mxu0 0.0
      %v621 = vand.u32 %v221, 4294901760
      %622 = vmatpush1.msra.mxu0 %v621
      %623 = vmatprep.subr.mxu0 0.0
      %v624 = vand.u32 %v222, 4294901760
      %625 = vmatpush1.msra.mxu0 %v624
      %626 = vmatprep.subr.mxu0 0.0
      %627 = vmatpush1.msra.mxu0 0.0
      %628 = vmatprep.subr.mxu0 0.0
      %629 = vmatpush1.msra.mxu0 0.0
      %630 = vmatprep.subr.mxu0 0.0
      %631 = vmatpush1.msra.mxu0 0.0
      %632 = vmatprep.subr.mxu0 0.0
      %633 = vmatpush1.msra.mxu0 0.0
      %634 = vmatprep.subr.mxu0 0.0
      %635 = vmatpush1.msra.mxu0 0.0
      %636 = vmatprep.subr.mxu0 0.0
      %637 = vmatpush1.msra.mxu0 0.0
      %638 = vmatprep.subr.mxu0 0.0
      %639 = vmatpush1.msra.mxu0 0.0
      %640 = vmatprep.subr.mxu0 0.0
      %641 = vmatpush1.msra.mxu0 0.0
      %642 = vmatprep.subr.mxu0 0.0
      %643 = vmatpush1.msra.mxu0 0.0
      %644 = vmatprep.subr.mxu0 0.0
      %645 = vmatpush1.msra.mxu0 0.0
      %646 = vmatprep.subr.mxu0 0.0
      %647 = vmatpush1.msra.mxu0 0.0
      %648 = vmatprep.subr.mxu0 0.0
      %649 = vmatpush1.msra.mxu0 0.0
      %650 = vmatprep.subr.mxu0 0.0
      %651 = vmatpush1.msra.mxu0 0.0
      %652 = vmatprep.subr.mxu0 0.0
      %653 = vmatpush1.msra.mxu0 0.0
      %654 = vmatprep.subr.mxu0 0.0
      %655 = vmatpush1.msra.mxu0 0.0
      %656 = vmatprep.subr.mxu0 0.0
      %657 = vmatpush1.msra.mxu0 0.0
      %658 = vmatprep.subr.mxu0 0.0
      %659 = vmatpush1.msra.mxu0 0.0
      %660 = vmatprep.subr.mxu0 0.0
      %661 = vmatpush1.msra.mxu0 0.0
      %662 = vmatprep.subr.mxu0 0.0
      %663 = vmatpush1.msra.mxu0 0.0
      %664 = vmatprep.subr.mxu0 0.0
      %665 = vmatpush1.msra.mxu0 0.0
      %666 = vmatprep.subr.mxu0 0.0
      %667 = vmatpush1.msra.mxu0 0.0
      %668 = vmatprep.subr.mxu0 0.0
      %669 = vmatpush1.msra.mxu0 0.0
      %670 = vmatprep.subr.mxu0 0.0
      %671 = vmatpush1.msra.mxu0 0.0
      %672 = vmatprep.subr.mxu0 0.0
      %673 = vmatpush1.msra.mxu0 0.0
      %674 = vmatprep.subr.mxu0 0.0
      %675 = vmatpush1.msra.mxu0 0.0
      %676 = vmatprep.subr.mxu0 0.0
      %677 = vmatpush1.msra.mxu0 0.0
      %678 = vmatprep.subr.mxu0 0.0
      %679 = vmatpush1.msra.mxu0 0.0
      %680 = vmatprep.subr.mxu0 0.0
      %681 = vmatpush1.msra.mxu0 0.0
      %682 = vmatprep.subr.mxu0 0.0
      %683 = vmatpush1.msra.mxu0 0.0
      %684 = vmatprep.subr.mxu0 0.0
      %685 = vmatpush1.msra.mxu0 0.0
      %686 = vmatprep.mubr.f32.mxu0 0.0
      %v687 = vand.u32 %v232, 4294901760
      %688 = vmatmul.mubr.f32.gmra.mrb[0].mxu0 %v687
      %v689 = vpop.f32.mrb[0].mxu0
      %v690 = vadd.f32 %v617, %v689
      %v691 = vpop.f32.mrb[0].mxu0
      %692 = vdwg.mxu0
      %vm693 = vcmp.ge.f32.partialorder %v690, 0.0
      %v694 = vmul.f32 %v690, 0.1
      %v695 = vsel %vm693, %v690, %v694
      %v696 = vld [vmem:[%s3] sm:$0xff]
      %v697 = vld [vmem:[%s4] sm:$0x1]
      %v699 = vlaneseq
      %v700 = vshrl.u32 %v699, 7
      %v701 = vsub.s32 0, %v700
      %v702 = vrot.slane %v697, %v701
      %vm704 = vcmask 64512
      %v706 = vsel %vm704, %v695, 0
      %708 = vmatprep.subr.mxu0 0.0
      %v709 = vand.u32 %v696, 4294901760
      %710 = vmatpush1.msra.mxu0 %v709
      %711 = vmatprep.subr.mxu0 0.0
      %712 = vmatpush1.msra.mxu0 0.0
      %713 = vmatprep.subr.mxu0 0.0
      %714 = vmatpush1.msra.mxu0 0.0
      %715 = vmatprep.subr.mxu0 0.0
      %716 = vmatpush1.msra.mxu0 0.0
      %717 = vmatprep.subr.mxu0 0.0
      %718 = vmatpush1.msra.mxu0 0.0
      %719 = vmatprep.subr.mxu0 0.0
      %720 = vmatpush1.msra.mxu0 0.0
      %721 = vmatprep.subr.mxu0 0.0
      %722 = vmatpush1.msra.mxu0 0.0
      %723 = vmatprep.subr.mxu0 0.0
      %724 = vmatpush1.msra.mxu0 0.0
      %725 = vmatprep.subr.mxu0 0.0
      %726 = vmatpush1.msra.mxu0 0.0
      %727 = vmatprep.subr.mxu0 0.0
      %728 = vmatpush1.msra.mxu0 0.0
      %729 = vmatprep.subr.mxu0 0.0
      %730 = vmatpush1.msra.mxu0 0.0
      %731 = vmatprep.subr.mxu0 0.0
      %732 = vmatpush1.msra.mxu0 0.0
      %733 = vmatprep.subr.mxu0 0.0
      %734 = vmatpush1.msra.mxu0 0.0
      %735 = vmatprep.subr.mxu0 0.0
      %736 = vmatpush1.msra.mxu0 0.0
      %737 = vmatprep.subr.mxu0 0.0
      %738 = vmatpush1.msra.mxu0 0.0
      %739 = vmatprep.subr.mxu0 0.0
      %740 = vmatpush1.msra.mxu0 0.0
      %741 = vmatprep.subr.mxu0 0.0
      %742 = vmatpush1.msra.mxu0 0.0
      %743 = vmatprep.subr.mxu0 0.0
      %744 = vmatpush1.msra.mxu0 0.0
      %745 = vmatprep.subr.mxu0 0.0
      %746 = vmatpush1.msra.mxu0 0.0
      %747 = vmatprep.subr.mxu0 0.0
      %748 = vmatpush1.msra.mxu0 0.0
      %749 = vmatprep.subr.mxu0 0.0
      %750 = vmatpush1.msra.mxu0 0.0
      %751 = vmatprep.subr.mxu0 0.0
      %752 = vmatpush1.msra.mxu0 0.0
      %753 = vmatprep.subr.mxu0 0.0
      %754 = vmatpush1.msra.mxu0 0.0
      %755 = vmatprep.subr.mxu0 0.0
      %756 = vmatpush1.msra.mxu0 0.0
      %757 = vmatprep.subr.mxu0 0.0
      %758 = vmatpush1.msra.mxu0 0.0
      %759 = vmatprep.subr.mxu0 0.0
      %760 = vmatpush1.msra.mxu0 0.0
      %761 = vmatprep.subr.mxu0 0.0
      %762 = vmatpush1.msra.mxu0 0.0
      %763 = vmatprep.subr.mxu0 0.0
      %764 = vmatpush1.msra.mxu0 0.0
      %765 = vmatprep.subr.mxu0 0.0
      %766 = vmatpush1.msra.mxu0 0.0
      %767 = vmatprep.subr.mxu0 0.0
      %768 = vmatpush1.msra.mxu0 0.0
      %769 = vmatprep.subr.mxu0 0.0
      %770 = vmatpush1.msra.mxu0 0.0
      %771 = vmatprep.subr.mxu0 0.0
      %772 = vmatpush1.msra.mxu0 0.0
      %773 = vmatprep.mubr.f32.mxu0 0.0
      %v774 = vand.u32 %v706, 4294901760
      %v775 = vsub.f32 %v706, %v774
      %v776 = vand.u32 %v775, 4294901760
      %v777 = vsub.f32 %v775, %v776
      %v778 = vand.u32 %v777, 4294901760
      %779 = vmatmul.mubr.f32.gmra.mrb[0].mxu0 %v778
      %v780 = vpop.f32.mrb[0].mxu0
      %v781 = vadd.f32 %v702, %v780
      %v782 = vpop.f32.mrb[0].mxu0
      %783 = vdwg.mxu0
      %784 = vmatprep.subr.mxu0 0.0
      %v785 = vand.u32 %v696, 4294901760
      %v786 = vsub.f32 %v696, %v785
      %v787 = vand.u32 %v786, 4294901760
      %v788 = vsub.f32 %v786, %v787
      %v789 = vand.u32 %v788, 4294901760
      %790 = vmatpush1.msra.mxu0 %v789
      %791 = vmatprep.subr.mxu0 0.0
      %792 = vmatpush1.msra.mxu0 0.0
      %793 = vmatprep.subr.mxu0 0.0
      %794 = vmatpush1.msra.mxu0 0.0
      %795 = vmatprep.subr.mxu0 0.0
      %796 = vmatpush1.msra.mxu0 0.0
      %797 = vmatprep.subr.mxu0 0.0
      %798 = vmatpush1.msra.mxu0 0.0
      %799 = vmatprep.subr.mxu0 0.0
      %800 = vmatpush1.msra.mxu0 0.0
      %801 = vmatprep.subr.mxu0 0.0
      %802 = vmatpush1.msra.mxu0 0.0
      %803 = vmatprep.subr.mxu0 0.0
      %804 = vmatpush1.msra.mxu0 0.0
      %805 = vmatprep.subr.mxu0 0.0
      %806 = vmatpush1.msra.mxu0 0.0
      %807 = vmatprep.subr.mxu0 0.0
      %808 = vmatpush1.msra.mxu0 0.0
      %809 = vmatprep.subr.mxu0 0.0
      %810 = vmatpush1.msra.mxu0 0.0
      %811 = vmatprep.subr.mxu0 0.0
      %812 = vmatpush1.msra.mxu0 0.0
      %813 = vmatprep.subr.mxu0 0.0
      %814 = vmatpush1.msra.mxu0 0.0
      %815 = vmatprep.subr.mxu0 0.0
      %816 = vmatpush1.msra.mxu0 0.0
      %817 = vmatprep.subr.mxu0 0.0
      %818 = vmatpush1.msra.mxu0 0.0
      %819 = vmatprep.subr.mxu0 0.0
      %820 = vmatpush1.msra.mxu0 0.0
      %821 = vmatprep.subr.mxu0 0.0
      %822 = vmatpush1.msra.mxu0 0.0
      %823 = vmatprep.subr.mxu0 0.0
      %824 = vmatpush1.msra.mxu0 0.0
      %825 = vmatprep.subr.mxu0 0.0
      %826 = vmatpush1.msra.mxu0 0.0
      %827 = vmatprep.subr.mxu0 0.0
      %828 = vmatpush1.msra.mxu0 0.0
      %829 = vmatprep.subr.mxu0 0.0
      %830 = vmatpush1.msra.mxu0 0.0
      %831 = vmatprep.subr.mxu0 0.0
      %832 = vmatpush1.msra.mxu0 0.0
      %833 = vmatprep.subr.mxu0 0.0
      %834 = vmatpush1.msra.mxu0 0.0
      %835 = vmatprep.subr.mxu0 0.0
      %836 = vmatpush1.msra.mxu0 0.0
      %837 = vmatprep.subr.mxu0 0.0
      %838 = vmatpush1.msra.mxu0 0.0
      %839 = vmatprep.subr.mxu0 0.0
      %840 = vmatpush1.msra.mxu0 0.0
      %841 = vmatprep.subr.mxu0 0.0
      %842 = vmatpush1.msra.mxu0 0.0
      %843 = vmatprep.subr.mxu0 0.0
      %844 = vmatpush1.msra.mxu0 0.0
      %845 = vmatprep.subr.mxu0 0.0
      %846 = vmatpush1.msra.mxu0 0.0
      %847 = vmatprep.subr.mxu0 0.0
      %848 = vmatpush1.msra.mxu0 0.0
      %849 = vmatprep.subr.mxu0 0.0
      %850 = vmatpush1.msra.mxu0 0.0
      %851 = vmatprep.subr.mxu0 0.0
      %852 = vmatpush1.msra.mxu0 0.0
      %853 = vmatprep.mubr.f32.mxu0 0.0
      %v854 = vand.u32 %v706, 4294901760
      %855 = vmatmul.mubr.f32.gmra.mrb[0].mxu0 %v854
      %v856 = vpop.f32.mrb[0].mxu0
      %v857 = vadd.f32 %v781, %v856
      %v858 = vpop.f32.mrb[0].mxu0
      %859 = vdwg.mxu0
      %860 = vmatprep.subr.mxu0 0.0
      %v861 = vand.u32 %v696, 4294901760
      %v862 = vsub.f32 %v696, %v861
      %863 = vmatpush1.msra.mxu0 %v862
      %864 = vmatprep.subr.mxu0 0.0
      %865 = vmatpush1.msra.mxu0 0.0
      %866 = vmatprep.subr.mxu0 0.0
      %867 = vmatpush1.msra.mxu0 0.0
      %868 = vmatprep.subr.mxu0 0.0
      %869 = vmatpush1.msra.mxu0 0.0
      %870 = vmatprep.subr.mxu0 0.0
      %871 = vmatpush1.msra.mxu0 0.0
      %872 = vmatprep.subr.mxu0 0.0
      %873 = vmatpush1.msra.mxu0 0.0
      %874 = vmatprep.subr.mxu0 0.0
      %875 = vmatpush1.msra.mxu0 0.0
      %876 = vmatprep.subr.mxu0 0.0
      %877 = vmatpush1.msra.mxu0 0.0
      %878 = vmatprep.subr.mxu0 0.0
      %879 = vmatpush1.msra.mxu0 0.0
      %880 = vmatprep.subr.mxu0 0.0
      %881 = vmatpush1.msra.mxu0 0.0
      %882 = vmatprep.subr.mxu0 0.0
      %883 = vmatpush1.msra.mxu0 0.0
      %884 = vmatprep.subr.mxu0 0.0
      %885 = vmatpush1.msra.mxu0 0.0
      %886 = vmatprep.subr.mxu0 0.0
      %887 = vmatpush1.msra.mxu0 0.0
      %888 = vmatprep.subr.mxu0 0.0
      %889 = vmatpush1.msra.mxu0 0.0
      %890 = vmatprep.subr.mxu0 0.0
      %891 = vmatpush1.msra.mxu0 0.0
      %892 = vmatprep.subr.mxu0 0.0
      %893 = vmatpush1.msra.mxu0 0.0
      %894 = vmatprep.subr.mxu0 0.0
      %895 = vmatpush1.msra.mxu0 0.0
      %896 = vmatprep.subr.mxu0 0.0
      %897 = vmatpush1.msra.mxu0 0.0
      %898 = vmatprep.subr.mxu0 0.0
      %899 = vmatpush1.msra.mxu0 0.0
      %900 = vmatprep.subr.mxu0 0.0
      %901 = vmatpush1.msra.mxu0 0.0
      %902 = vmatprep.subr.mxu0 0.0
      %903 = vmatpush1.msra.mxu0 0.0
      %904 = vmatprep.subr.mxu0 0.0
      %905 = vmatpush1.msra.mxu0 0.0
      %906 = vmatprep.subr.mxu0 0.0
      %907 = vmatpush1.msra.mxu0 0.0
      %908 = vmatprep.subr.mxu0 0.0
      %909 = vmatpush1.msra.mxu0 0.0
      %910 = vmatprep.subr.mxu0 0.0
      %911 = vmatpush1.msra.mxu0 0.0
      %912 = vmatprep.subr.mxu0 0.0
      %913 = vmatpush1.msra.mxu0 0.0
      %914 = vmatprep.subr.mxu0 0.0
      %915 = vmatpush1.msra.mxu0 0.0
      %916 = vmatprep.subr.mxu0 0.0
      %917 = vmatpush1.msra.mxu0 0.0
      %918 = vmatprep.subr.mxu0 0.0
      %919 = vmatpush1.msra.mxu0 0.0
      %920 = vmatprep.subr.mxu0 0.0
      %921 = vmatpush1.msra.mxu0 0.0
      %922 = vmatprep.subr.mxu0 0.0
      %923 = vmatpush1.msra.mxu0 0.0
      %924 = vmatprep.subr.mxu0 0.0
      %925 = vmatpush1.msra.mxu0 0.0
      %926 = vmatprep.mubr.f32.mxu0 0.0
      %v927 = vand.u32 %v706, 4294901760
      %v928 = vsub.f32 %v706, %v927
      %929 = vmatmul.mubr.f32.gmra.mrb[0].mxu0 %v928
      %v930 = vpop.f32.mrb[0].mxu0
      %v931 = vadd.f32 %v857, %v930
      %v932 = vpop.f32.mrb[0].mxu0
      %933 = vdwg.mxu0
      %934 = vmatprep.subr.mxu0 0.0
      %v935 = vand.u32 %v696, 4294901760
      %936 = vmatpush1.msra.mxu0 %v935
      %937 = vmatprep.subr.mxu0 0.0
      %938 = vmatpush1.msra.mxu0 0.0
      %939 = vmatprep.subr.mxu0 0.0
      %940 = vmatpush1.msra.mxu0 0.0
      %941 = vmatprep.subr.mxu0 0.0
      %942 = vmatpush1.msra.mxu0 0.0
      %943 = vmatprep.subr.mxu0 0.0
      %944 = vmatpush1.msra.mxu0 0.0
      %945 = vmatprep.subr.mxu0 0.0
      %946 = vmatpush1.msra.mxu0 0.0
      %947 = vmatprep.subr.mxu0 0.0
      %948 = vmatpush1.msra.mxu0 0.0
      %949 = vmatprep.subr.mxu0 0.0
      %950 = vmatpush1.msra.mxu0 0.0
      %951 = vmatprep.subr.mxu0 0.0
      %952 = vmatpush1.msra.mxu0 0.0
      %953 = vmatprep.subr.mxu0 0.0
      %954 = vmatpush1.msra.mxu0 0.0
      %955 = vmatprep.subr.mxu0 0.0
      %956 = vmatpush1.msra.mxu0 0.0
      %957 = vmatprep.subr.mxu0 0.0
      %958 = vmatpush1.msra.mxu0 0.0
      %959 = vmatprep.subr.mxu0 0.0
      %960 = vmatpush1.msra.mxu0 0.0
      %961 = vmatprep.subr.mxu0 0.0
      %962 = vmatpush1.msra.mxu0 0.0
      %963 = vmatprep.subr.mxu0 0.0
      %964 = vmatpush1.msra.mxu0 0.0
      %965 = vmatprep.subr.mxu0 0.0
      %966 = vmatpush1.msra.mxu0 0.0
      %967 = vmatprep.subr.mxu0 0.0
      %968 = vmatpush1.msra.mxu0 0.0
      %969 = vmatprep.subr.mxu0 0.0
      %970 = vmatpush1.msra.mxu0 0.0
      %971 = vmatprep.subr.mxu0 0.0
      %972 = vmatpush1.msra.mxu0 0.0
      %973 = vmatprep.subr.mxu0 0.0
      %974 = vmatpush1.msra.mxu0 0.0
      %975 = vmatprep.subr.mxu0 0.0
      %976 = vmatpush1.msra.mxu0 0.0
      %977 = vmatprep.subr.mxu0 0.0
      %978 = vmatpush1.msra.mxu0 0.0
      %979 = vmatprep.subr.mxu0 0.0
      %980 = vmatpush1.msra.mxu0 0.0
      %981 = vmatprep.subr.mxu0 0.0
      %982 = vmatpush1.msra.mxu0 0.0
      %983 = vmatprep.subr.mxu0 0.0
      %984 = vmatpush1.msra.mxu0 0.0
      %985 = vmatprep.subr.mxu0 0.0
      %986 = vmatpush1.msra.mxu0 0.0
      %987 = vmatprep.subr.mxu0 0.0
      %988 = vmatpush1.msra.mxu0 0.0
      %989 = vmatprep.subr.mxu0 0.0
      %990 = vmatpush1.msra.mxu0 0.0
      %991 = vmatprep.subr.mxu0 0.0
      %992 = vmatpush1.msra.mxu0 0.0
      %993 = vmatprep.subr.mxu0 0.0
      %994 = vmatpush1.msra.mxu0 0.0
      %995 = vmatprep.subr.mxu0 0.0
      %996 = vmatpush1.msra.mxu0 0.0
      %997 = vmatprep.subr.mxu0 0.0
      %998 = vmatpush1.msra.mxu0 0.0
      %999 = vmatprep.mubr.f32.mxu0 0.0
      %v1000 = vand.u32 %v706, 4294901760
      %v1001 = vsub.f32 %v706, %v1000
      %v1002 = vand.u32 %v1001, 4294901760
      %1003 = vmatmul.mubr.f32.gmra.mrb[0].mxu0 %v1002
      %v1004 = vpop.f32.mrb[0].mxu0
      %v1005 = vadd.f32 %v931, %v1004
      %v1006 = vpop.f32.mrb[0].mxu0
      %1007 = vdwg.mxu0
      %1008 = vmatprep.subr.mxu0 0.0
      %v1009 = vand.u32 %v696, 4294901760
      %v1010 = vsub.f32 %v696, %v1009
      %v1011 = vand.u32 %v1010, 4294901760
      %1012 = vmatpush1.msra.mxu0 %v1011
      %1013 = vmatprep.subr.mxu0 0.0
      %1014 = vmatpush1.msra.mxu0 0.0
      %1015 = vmatprep.subr.mxu0 0.0
      %1016 = vmatpush1.msra.mxu0 0.0
      %1017 = vmatprep.subr.mxu0 0.0
      %1018 = vmatpush1.msra.mxu0 0.0
      %1019 = vmatprep.subr.mxu0 0.0
      %1020 = vmatpush1.msra.mxu0 0.0
      %1021 = vmatprep.subr.mxu0 0.0
      %1022 = vmatpush1.msra.mxu0 0.0
      %1023 = vmatprep.subr.mxu0 0.0
      %1024 = vmatpush1.msra.mxu0 0.0
      %1025 = vmatprep.subr.mxu0 0.0
      %1026 = vmatpush1.msra.mxu0 0.0
      %1027 = vmatprep.subr.mxu0 0.0
      %1028 = vmatpush1.msra.mxu0 0.0
      %1029 = vmatprep.subr.mxu0 0.0
      %1030 = vmatpush1.msra.mxu0 0.0
      %1031 = vmatprep.subr.mxu0 0.0
      %1032 = vmatpush1.msra.mxu0 0.0
      %1033 = vmatprep.subr.mxu0 0.0
      %1034 = vmatpush1.msra.mxu0 0.0
      %1035 = vmatprep.subr.mxu0 0.0
      %1036 = vmatpush1.msra.mxu0 0.0
      %1037 = vmatprep.subr.mxu0 0.0
      %1038 = vmatpush1.msra.mxu0 0.0
      %1039 = vmatprep.subr.mxu0 0.0
      %1040 = vmatpush1.msra.mxu0 0.0
      %1041 = vmatprep.subr.mxu0 0.0
      %1042 = vmatpush1.msra.mxu0 0.0
      %1043 = vmatprep.subr.mxu0 0.0
      %1044 = vmatpush1.msra.mxu0 0.0
      %1045 = vmatprep.subr.mxu0 0.0
      %1046 = vmatpush1.msra.mxu0 0.0
      %1047 = vmatprep.subr.mxu0 0.0
      %1048 = vmatpush1.msra.mxu0 0.0
      %1049 = vmatprep.subr.mxu0 0.0
      %1050 = vmatpush1.msra.mxu0 0.0
      %1051 = vmatprep.subr.mxu0 0.0
      %1052 = vmatpush1.msra.mxu0 0.0
      %1053 = vmatprep.subr.mxu0 0.0
      %1054 = vmatpush1.msra.mxu0 0.0
      %1055 = vmatprep.subr.mxu0 0.0
      %1056 = vmatpush1.msra.mxu0 0.0
      %1057 = vmatprep.subr.mxu0 0.0
      %1058 = vmatpush1.msra.mxu0 0.0
      %1059 = vmatprep.subr.mxu0 0.0
      %1060 = vmatpush1.msra.mxu0 0.0
      %1061 = vmatprep.subr.mxu0 0.0
      %1062 = vmatpush1.msra.mxu0 0.0
      %1063 = vmatprep.subr.mxu0 0.0
      %1064 = vmatpush1.msra.mxu0 0.0
      %1065 = vmatprep.subr.mxu0 0.0
      %1066 = vmatpush1.msra.mxu0 0.0
      %1067 = vmatprep.subr.mxu0 0.0
      %1068 = vmatpush1.msra.mxu0 0.0
      %1069 = vmatprep.subr.mxu0 0.0
      %1070 = vmatpush1.msra.mxu0 0.0
      %1071 = vmatprep.subr.mxu0 0.0
      %1072 = vmatpush1.msra.mxu0 0.0
      %1073 = vmatprep.subr.mxu0 0.0
      %1074 = vmatpush1.msra.mxu0 0.0
      %1075 = vmatprep.mubr.f32.mxu0 0.0
      %v1076 = vand.u32 %v706, 4294901760
      %1077 = vmatmul.mubr.f32.gmra.mrb[0].mxu0 %v1076
      %v1078 = vpop.f32.mrb[0].mxu0
      %v1079 = vadd.f32 %v1005, %v1078
      %v1080 = vpop.f32.mrb[0].mxu0
      %1081 = vdwg.mxu0
      %1082 = vmatprep.subr.mxu0 0.0
      %v1083 = vand.u32 %v696, 4294901760
      %1084 = vmatpush1.msra.mxu0 %v1083
      %1085 = vmatprep.subr.mxu0 0.0
      %1086 = vmatpush1.msra.mxu0 0.0
      %1087 = vmatprep.subr.mxu0 0.0
      %1088 = vmatpush1.msra.mxu0 0.0
      %1089 = vmatprep.subr.mxu0 0.0
      %1090 = vmatpush1.msra.mxu0 0.0
      %1091 = vmatprep.subr.mxu0 0.0
      %1092 = vmatpush1.msra.mxu0 0.0
      %1093 = vmatprep.subr.mxu0 0.0
      %1094 = vmatpush1.msra.mxu0 0.0
      %1095 = vmatprep.subr.mxu0 0.0
      %1096 = vmatpush1.msra.mxu0 0.0
      %1097 = vmatprep.subr.mxu0 0.0
      %1098 = vmatpush1.msra.mxu0 0.0
      %1099 = vmatprep.subr.mxu0 0.0
      %1100 = vmatpush1.msra.mxu0 0.0
      %1101 = vmatprep.subr.mxu0 0.0
      %1102 = vmatpush1.msra.mxu0 0.0
      %1103 = vmatprep.subr.mxu0 0.0
      %1104 = vmatpush1.msra.mxu0 0.0
      %1105 = vmatprep.subr.mxu0 0.0
      %1106 = vmatpush1.msra.mxu0 0.0
      %1107 = vmatprep.subr.mxu0 0.0
      %1108 = vmatpush1.msra.mxu0 0.0
      %1109 = vmatprep.subr.mxu0 0.0
      %1110 = vmatpush1.msra.mxu0 0.0
      %1111 = vmatprep.subr.mxu0 0.0
      %1112 = vmatpush1.msra.mxu0 0.0
      %1113 = vmatprep.subr.mxu0 0.0
      %1114 = vmatpush1.msra.mxu0 0.0
      %1115 = vmatprep.subr.mxu0 0.0
      %1116 = vmatpush1.msra.mxu0 0.0
      %1117 = vmatprep.subr.mxu0 0.0
      %1118 = vmatpush1.msra.mxu0 0.0
      %1119 = vmatprep.subr.mxu0 0.0
      %1120 = vmatpush1.msra.mxu0 0.0
      %1121 = vmatprep.subr.mxu0 0.0
      %1122 = vmatpush1.msra.mxu0 0.0
      %1123 = vmatprep.subr.mxu0 0.0
      %1124 = vmatpush1.msra.mxu0 0.0
      %1125 = vmatprep.subr.mxu0 0.0
      %1126 = vmatpush1.msra.mxu0 0.0
      %1127 = vmatprep.subr.mxu0 0.0
      %1128 = vmatpush1.msra.mxu0 0.0
      %1129 = vmatprep.subr.mxu0 0.0
      %1130 = vmatpush1.msra.mxu0 0.0
      %1131 = vmatprep.subr.mxu0 0.0
      %1132 = vmatpush1.msra.mxu0 0.0
      %1133 = vmatprep.subr.mxu0 0.0
      %1134 = vmatpush1.msra.mxu0 0.0
      %1135 = vmatprep.subr.mxu0 0.0
      %1136 = vmatpush1.msra.mxu0 0.0
      %1137 = vmatprep.subr.mxu0 0.0
      %1138 = vmatpush1.msra.mxu0 0.0
      %1139 = vmatprep.subr.mxu0 0.0
      %1140 = vmatpush1.msra.mxu0 0.0
      %1141 = vmatprep.subr.mxu0 0.0
      %1142 = vmatpush1.msra.mxu0 0.0
      %1143 = vmatprep.subr.mxu0 0.0
      %1144 = vmatpush1.msra.mxu0 0.0
      %1145 = vmatprep.subr.mxu0 0.0
      %1146 = vmatpush1.msra.mxu0 0.0
      %1147 = vmatprep.mubr.f32.mxu0 0.0
      %v1148 = vand.u32 %v706, 4294901760
      %1149 = vmatmul.mubr.f32.gmra.mrb[0].mxu0 %v1148
      %v1150 = vpop.f32.mrb[0].mxu0
      %v1151 = vadd.f32 %v1079, %v1150
      %v1152 = vpop.f32.mrb[0].mxu0
      %1153 = vdwg.mxu0
      %v1154 = vsel %vm230, %v1151, -inf
      %1155 = vmax.xlane.f32.xlu0 %v1154
      %v1156 = vpop.xlane.xlu0 %1155
      %v1157 = vsub.f32 %v1151, %v1156
      %v1158 = vmul.f32 %v1157, 1.442695
      %v1159 = vpow.pop %v1158
      %v1160 = vsel %vm230, %v1159, 0.0
      %1161 = vadd.xlane.f32.xlu0 %v1160
      %v1162 = vpop.xlane.xlu0 %1161
      %v1163 = vrcp.pop %v1162
      %v1164 = vmul.f32 %v1159, %v1163
      %1165 = vst.msk [vmem:[%s219] sm:$0xff] %vm230, %v1164
      %p1166 = scmp.lt.s32.totalorder %s16, 1
      %s1167 = scalar_select %p1166, %s16, 1
      %s1168 = smul.addr %s1167, 8
      %s1169 = scalar_lea.vmem %s5, %s1168
      // Predicated region
      $region41: #{cab3d_forward.1} parent=39 // pred_check
        %p1170 = pneg %p144
      $region42: #{cab3d_forward.1} parent=39 // pred_check_branch
        %1172 = sbr.rel (%p1170) target = $region44
      $region43: #{cab3d_forward.1} parent=39 // pred_region
        _
      $region44: #{cab3d_forward.1} parent=39 // pred_fallthru
        _
    $region40: #{cab3d_forward.1} parent=5 // pred_fallthru
      _
    %p1173 = scmp.le.s32.totalorder 2, %s11
    // Predicated region
    $region45: #{cab3d_forward.1} parent=5 // pred_check
      %p1174 = pneg %p1173
    $region46: #{cab3d_forward.1} parent=5 // pred_check_branch
      %1176 = sbr.rel (%p1174) target = $region48
    $region47: #{cab3d_forward.1} parent=5 // pred_region
      %s1177 = ssub.s32 %s11, 2
      // Predicated region
      $region49: #{cab3d_forward.1} parent=47 // pred_check
        %p1178 = pneg %p150
      $region50: #{cab3d_forward.1} parent=47 // pred_check_branch
        %1180 = sbr.rel (%p1178) target = $region52
      $region51: #{cab3d_forward.1} parent=47 // pred_region
        %p1181 = scmp.lt.s32.totalorder %s17, 1
        %s1182 = scalar_select %p1181, %s17, 1
        %s1183 = smul.addr %s1182, 8
        %s1184 = scalar_lea.vmem %s5, %s1183
      $region52: #{cab3d_forward.1} parent=47 // pred_fallthru
        _
    $region48: #{cab3d_forward.1} parent=5 // pred_fallthru
      _
  $region6: #{cab3d_forward.1} parent=0 // loop_footer
    %s15 = sadd.s32 1, %s11
  $region7: #{cab3d_forward.1} parent=0 // loop_footer_branch
    %10 = sbr.rel target = $region3
  $region8: #{cab3d_forward.1} parent=0 // loop_exit
    _

</llo_original>
